<compile_context>
chip_gen: v6e
topology: v6e:2x2x1
jax: 0.10.0
libtpu: 0.0.40
codegen_flags: <defaults>
</compile_context>

<pallas_src>
import functools

import jax
import jax.numpy as jnp
from jax import lax
from jax.experimental import pallas as pl
from jax.experimental.pallas import tpu as pltpu


def _vmem_budget_bytes():
    """~75% of this chip's physical VMEM; conservative default if unknown."""
    cap = None
    try:
        cap = getattr(pltpu.get_tpu_info(), "vmem_capacity_bytes", None)
    except Exception:
        cap = None
    if not cap or cap <= 0:
        cap = 64 << 20  # v7x physical VMEM -- a safe lower bound on every gen
    return int(cap) * 3 // 4


# ---------------------------------------------------------------------------
# Primary path: single-visit slab kernel.  grid=(B,), block=(1, C, HW).
# One HBM read + one HBM write of the activation per batch element.
# ---------------------------------------------------------------------------
def _adailn_slab_kernel(*refs, eps, hw, n_ln, apply_relu, has_residual):
    if has_residual:
        x_ref, gamma_ref, beta_ref, rho_ref, res_ref, o_ref = refs
    else:
        x_ref, gamma_ref, beta_ref, rho_ref, o_ref = refs
        res_ref = None

    x = x_ref[0].astype(jnp.float32)                              # (C, HW)

    # Instance-norm stats (per channel over HW), centered two-pass variance.
    ch_sum = jnp.sum(x, axis=1, keepdims=True)                    # (C, 1)
    in_mean = ch_sum / hw
    centered = x - in_mean
    ch_css = jnp.sum(centered * centered, axis=1, keepdims=True)  # centered SS
    in_var = ch_css / (hw - 1.0)                                  # unbiased (torch.var)
    r_in = lax.rsqrt(in_var + eps)                                # (C, 1)

    # Layer-norm stats via exact parallel combination of per-channel partials:
    #   SS_total = sum_c [ SS_c + hw * (mean_c - grand_mean)^2 ]
    ln_mean = jnp.sum(ch_sum) / n_ln                              # scalar
    d = in_mean - ln_mean
    ln_var = jnp.sum(ch_css + hw * d * d) / (n_ln - 1.0)          # scalar, unbiased
    r_ln = lax.rsqrt(ln_var + eps)

    rho = rho_ref[0].astype(jnp.float32)                          # (C, 1)
    gamma = gamma_ref[0].astype(jnp.float32)
    beta = beta_ref[0].astype(jnp.float32)

    # Fold IN/LN mix + affine into per-channel scale s / offset t.
    mix_scale = rho * r_in + (1.0 - rho) * r_ln
    mix_shift = rho * (in_mean * r_in) + (1.0 - rho) * (ln_mean * r_ln)
    s = gamma * mix_scale
    t = beta - gamma * mix_shift

    out = x * s + t
    if apply_relu:                                                # norm1 + relu1
        out = jnp.maximum(out, 0.0)
    if has_residual:                                              # norm2 + skip add
        out = out + res_ref[0].astype(jnp.float32)
    o_ref[0] = out.astype(o_ref.dtype)


# ---------------------------------------------------------------------------
# Fallback path (HW slab does not fit VMEM): stats kernel + apply kernel.
# ---------------------------------------------------------------------------
def _stats_kernel(x_ref, sum_ref, sumsq_ref):
    t = pl.program_id(1)

    @pl.when(t == 0)
    def _():
        sum_ref[...] = jnp.zeros_like(sum_ref)
        sumsq_ref[...] = jnp.zeros_like(sumsq_ref)

    x = x_ref[0].astype(jnp.float32)                              # (C, TILE)
    sum_ref[0] += jnp.sum(x, axis=1, keepdims=True)               # (C, 1)
    sumsq_ref[0] += jnp.sum(x * x, axis=1, keepdims=True)         # (C, 1)


def _apply_kernel(*refs, apply_relu, has_residual):
    if has_residual:
        x_ref, s_ref, t_ref, res_ref, o_ref = refs
    else:
        x_ref, s_ref, t_ref, o_ref = refs
        res_ref = None
    x = x_ref[0].astype(jnp.float32)                              # (C, TILE)
    out = x * s_ref[0] + t_ref[0]
    if apply_relu:
        out = jnp.maximum(out, 0.0)
    if has_residual:
        out = out + res_ref[0].astype(jnp.float32)
    o_ref[0] = out.astype(o_ref.dtype)


def adailn_forward(x, gamma, beta, rho, eps=1e-5, apply_relu=False,
                   residual=None, max_tile=2048, force_two_pass=False):
    """adaILN forward.  x: (B,C,H,W); gamma/beta: (B,C) (or broadcastable to it);
    rho: (1,C,1,1).  Optional fused ReLU and fused residual add.  Output dtype ==
    input dtype; all statistics in f32 with torch-matching unbiased variance."""
    B, C, H, W = x.shape
    HW = H * W
    has_residual = residual is not None

    x_flat = x.reshape(B, C, HW)
    res_flat = residual.reshape(B, C, HW) if has_residual else None
    gamma_col = jnp.broadcast_to(jnp.asarray(gamma).reshape(-1, C), (B, C)).reshape(B, C, 1)
    beta_col = jnp.broadcast_to(jnp.asarray(beta).reshape(-1, C), (B, C)).reshape(B, C, 1)
    rho_col = jnp.asarray(rho).reshape(1, C, 1)

    budget = _vmem_budget_bytes()
    itemsize = jnp.dtype(x.dtype).itemsize
    n_streams = 3 if has_residual else 2                 # x, out, [residual]
    slab_need = (2 * n_streams * C * HW * itemsize       # double-buffered blocks
                 + 3 * C * HW * 4                        # f32 working copies in body
                 + (4 << 20))                            # headroom
    use_slab = (not force_two_pass) and slab_need <= budget

    if use_slab:
        kernel = functools.partial(
            _adailn_slab_kernel, eps=float(eps), hw=float(HW),
            n_ln=float(C * HW), apply_relu=apply_relu, has_residual=has_residual)
        in_specs = [
            pl.BlockSpec((1, C, HW), lambda b: (b, 0, 0)),        # x slab
            pl.BlockSpec((1, C, 1), lambda b: (b, 0, 0)),         # gamma
            pl.BlockSpec((1, C, 1), lambda b: (b, 0, 0)),         # beta
            pl.BlockSpec((1, C, 1), lambda b: (0, 0, 0)),         # rho (shared)
        ]
        args = [x_flat, gamma_col, beta_col, rho_col]
        if has_residual:
            in_specs.append(pl.BlockSpec((1, C, HW), lambda b: (b, 0, 0)))
            args.append(res_flat)
        out_flat = pl.pallas_call(
            kernel,
            out_shape=jax.ShapeDtypeStruct((B, C, HW), x.dtype),
            grid_spec=pltpu.PrefetchScalarGridSpec(
                num_scalar_prefetch=0,
                grid=(B,),
                in_specs=in_specs,
                out_specs=pl.BlockSpec((1, C, HW), lambda b: (b, 0, 0)),
            ),
            compiler_params=pltpu.CompilerParams(
                dimension_semantics=("parallel",),
                vmem_limit_bytes=budget,
            ),
        )(*args)
        return out_flat.reshape(B, C, H, W)

    # -------- fallback: tiled two-pass (stats kernel -> tiny jnp fold -> apply) ---
    tile = max(128, (min(max_tile, HW + 127) // 128) * 128)      # lane-dense tile
    n_tiles = pl.cdiv(HW, tile)
    HWp = n_tiles * tile
    if HWp != HW:
        pad = [(0, 0), (0, 0), (0, HWp - HW)]
        x_flat = jnp.pad(x_flat, pad)            # zero pad -> sums/sumsq unaffected
        if has_residual:
            res_flat = jnp.pad(res_flat, pad)

    ch_sum, ch_sumsq = pl.pallas_call(
        _stats_kernel,
        out_shape=(jax.ShapeDtypeStruct((B, C, 1), jnp.float32),
                   jax.ShapeDtypeStruct((B, C, 1), jnp.float32)),
        grid_spec=pltpu.PrefetchScalarGridSpec(
            num_scalar_prefetch=0,
            grid=(B, n_tiles),
            in_specs=[pl.BlockSpec((1, C, tile), lambda b, t: (b, 0, t))],
            out_specs=(pl.BlockSpec((1, C, 1), lambda b, t: (b, 0, 0)),
                       pl.BlockSpec((1, C, 1), lambda b, t: (b, 0, 0))),
        ),
        compiler_params=pltpu.CompilerParams(
            dimension_semantics=("parallel", "arbitrary"),
            vmem_limit_bytes=budget,
        ),
    )(x_flat)

    # Fold IN/LN stats + rho mix + affine into per-channel scale/offset (tiny B*C
    # math, left to XLA).  NOTE: E[x^2]-mean^2 form here; the primary slab path
    # uses centered two-pass variance and covers all shapes of this generator.
    hw_f, n_ln = float(HW), float(C * HW)
    in_mean = ch_sum / hw_f
    in_var = (ch_sumsq - hw_f * in_mean * in_mean) / (hw_f - 1.0)
    r_in = lax.rsqrt(in_var + eps)
    ln_mean = jnp.sum(ch_sum, axis=1, keepdims=True) / n_ln
    ln_var = (jnp.sum(ch_sumsq, axis=1, keepdims=True)
              - n_ln * ln_mean * ln_mean) / (n_ln - 1.0)
    r_ln = lax.rsqrt(ln_var + eps)
    g32 = gamma_col.astype(jnp.float32)
    b32 = beta_col.astype(jnp.float32)
    rho32 = rho_col.astype(jnp.float32)
    s_col = g32 * (rho32 * r_in + (1.0 - rho32) * r_ln)
    t_col = b32 - g32 * (rho32 * (in_mean * r_in) + (1.0 - rho32) * (ln_mean * r_ln))

    kernel = functools.partial(_apply_kernel, apply_relu=apply_relu,
                               has_residual=has_residual)
    in_specs = [
        pl.BlockSpec((1, C, tile), lambda b, t: (b, 0, t)),
        pl.BlockSpec((1, C, 1), lambda b, t: (b, 0, 0)),
        pl.BlockSpec((1, C, 1), lambda b, t: (b, 0, 0)),
    ]
    args = [x_flat, s_col, t_col]
    if has_residual:
        in_specs.append(pl.BlockSpec((1, C, tile), lambda b, t: (b, 0, t)))
        args.append(res_flat)
    out_flat = pl.pallas_call(
        kernel,
        out_shape=jax.ShapeDtypeStruct((B, C, HWp), x.dtype),
        grid_spec=pltpu.PrefetchScalarGridSpec(
            num_scalar_prefetch=0,
            grid=(B, n_tiles),
            in_specs=in_specs,
            out_specs=pl.BlockSpec((1, C, tile), lambda b, t: (b, 0, t)),
        ),
        compiler_params=pltpu.CompilerParams(
            dimension_semantics=("parallel", "parallel"),
            vmem_limit_bytes=budget,
        ),
    )(*args)
    return out_flat[:, :, :HW].reshape(B, C, H, W)


def iln_forward(x, rho, gamma, beta, eps=1e-5, apply_relu=False, residual=None):
    """ILN module (per-module learned gamma/beta/rho of shape (1,C,1,1))."""
    return adailn_forward(x, gamma, beta, rho, eps=eps,
                          apply_relu=apply_relu, residual=residual)


def adailn_reference(x, gamma, beta, rho, eps=1e-5):
    """Pure-JAX reference matching the PyTorch semantics (unbiased variance)."""
    x = x.astype(jnp.float32)
    in_mean = jnp.mean(x, axis=(2, 3), keepdims=True)
    in_var = jnp.var(x, axis=(2, 3), keepdims=True, ddof=1)
    out_in = (x - in_mean) / jnp.sqrt(in_var + eps)
    ln_mean = jnp.mean(x, axis=(1, 2, 3), keepdims=True)
    ln_var = jnp.var(x, axis=(1, 2, 3), keepdims=True, ddof=1)
    out_ln = (x - ln_mean) / jnp.sqrt(ln_var + eps)
    out = rho * out_in + (1.0 - rho) * out_ln
    return out * gamma[:, :, None, None] + beta[:, :, None, None]


if __name__ == "__main__":
    key = jax.random.PRNGKey(0)
    kx, kg, kb, kr = jax.random.split(key, 4)

    B, C, H, W = 2, 4, 16, 16
    x = jax.random.normal(kx, (B, C, H, W), dtype=jnp.float32)
    gamma = jax.random.normal(kg, (B, C), dtype=jnp.float32)
    beta = jax.random.normal(kb, (B, C), dtype=jnp.float32)
    res = jax.random.normal(kr, (B, C, H, W), dtype=jnp.float32)
    rho = jnp.full((1, C, 1, 1), 0.9, dtype=jnp.float32)   # adaILN init

    ref = adailn_reference(x, gamma, beta, rho)

    # 1) Primary single-read/single-write slab path.
    out = jax.block_until_ready(adailn_forward(x, gamma, beta, rho))
    assert out.shape == (B, C, H, W) and out.dtype == x.dtype
    assert jnp.allclose(out, ref, atol=1e-4, rtol=1e-4), "slab mismatch"

    # 2) Fused ReLU (norm1 + relu1 in ResnetAdaILNBlock).
    out_relu = jax.block_until_ready(
        adailn_forward(x, gamma, beta, rho, apply_relu=True))
    assert jnp.allclose(out_relu, jnp.maximum(ref, 0.0), atol=1e-4, rtol=1e-4), \
        "fused-relu mismatch"

    # 3) Fused residual (norm2 + skip add in ResnetAdaILNBlock / Recon_Middle).
    out_res = jax.block_until_ready(
        adailn_forward(x, gamma, beta, rho, residual=res))
    assert jnp.allclose(out_res, ref + res, atol=1e-4, rtol=1e-4), \
        "fused-residual mismatch"

    # 4) Forced two-pass tiled fallback (exercises multi-tile accumulation path).
    out_fb = jax.block_until_ready(
        adailn_forward(x, gamma, beta, rho, force_two_pass=True, max_tile=128))
    assert jnp.allclose(out_fb, ref, atol=1e-4, rtol=1e-4), "fallback mismatch"

    # 5) Non-128-multiple HW: slab path (full-extent block) and padded fallback.
    x2 = jax.random.normal(kx, (B, C, 18, 18), dtype=jnp.float32)
    ref2 = adailn_reference(x2, gamma, beta, rho)
    out2 = jax.block_until_ready(adailn_forward(x2, gamma, beta, rho))
    assert jnp.allclose(out2, ref2, atol=1e-4, rtol=1e-4), "odd-HW slab mismatch"
    out2_fb = jax.block_until_ready(
        adailn_forward(x2, gamma, beta, rho, force_two_pass=True, max_tile=128))
    assert jnp.allclose(out2_fb, ref2, atol=1e-4, rtol=1e-4), \
        "odd-HW padded-fallback mismatch"

    # 6) ILN flavor (rho init 0.0, per-module gamma/beta of shape (1,C,1,1)).
    g_iln = jnp.ones((1, C, 1, 1), jnp.float32)
    b_iln = jnp.zeros((1, C, 1, 1), jnp.float32)
    rho0 = jnp.zeros((1, C, 1, 1), jnp.float32)
    ref_iln = adailn_reference(
        x, jnp.broadcast_to(g_iln.reshape(1, C), (B, C)),
        jnp.broadcast_to(b_iln.reshape(1, C), (B, C)), rho0)
    out_iln = jax.block_until_ready(iln_forward(x, rho0, g_iln, b_iln))
    assert jnp.allclose(out_iln, ref_iln, atol=1e-4, rtol=1e-4), "ILN mismatch"

    print("KERNEL_OK")
</pallas_src>

<mosaic_0001>
module attributes {stable_mosaic.version = 11 : i64} {
  func.func @_adailn_slab_kernel(%arg0: i32, %arg1: memref<1x4x256xf32, #tpu.memory_space<vmem>>, %arg2: memref<1x4x1xf32, #tpu.memory_space<vmem>>, %arg3: memref<1x4x1xf32, #tpu.memory_space<vmem>>, %arg4: memref<1x4x1xf32, #tpu.memory_space<vmem>>, %arg5: memref<1x4x256xf32, #tpu.memory_space<vmem>>) attributes {dimension_semantics = [#tpu.dimension_semantics<parallel>], iteration_bounds = array<i64: 2>, scalar_prefetch = 0 : i64, scratch_operands = 0 : i64, tpu.core_type = #tpu.core_type<tc>, window_params = [{transform_indices = @transform_0, window_bounds = array<i64: 1, 4, 256>}, {transform_indices = @transform_1, window_bounds = array<i64: 1, 4, 1>}, {transform_indices = @transform_2, window_bounds = array<i64: 1, 4, 1>}, {pipeline_mode = #tpu.pipeline_mode<synchronous>, transform_indices = @transform_3, window_bounds = array<i64: 1, 4, 1>}, {transform_indices = @transform_4, window_bounds = array<i64: 1, 4, 256>}]} {
    %c0 = arith.constant 0 : index
    %c0_0 = arith.constant 0 : index
    %c0_1 = arith.constant 0 : index
    %0 = vector.load %arg1[%c0, %c0_0, %c0_1] : memref<1x4x256xf32, #tpu.memory_space<vmem>>, vector<1x4x256xf32>
    %1 = vector.shape_cast %0 : vector<1x4x256xf32> to vector<4x256xf32>
    %cst = arith.constant dense<0.000000e+00> : vector<4xf32>
    %2 = vector.multi_reduction <add>, %1, %cst [1] : vector<4x256xf32> to vector<4xf32>
    %3 = vector.shape_cast %2 : vector<4xf32> to vector<4x1xf32>
    %cst_2 = arith.constant 2.560000e+02 : f32
    %4 = vector.broadcast %cst_2 : f32 to vector<4x1xf32>
    %5 = arith.divf %3, %4 : vector<4x1xf32>
    %6 = vector.broadcast %5 : vector<4x1xf32> to vector<4x256xf32>
    %7 = arith.subf %1, %6 : vector<4x256xf32>
    %8 = arith.mulf %7, %7 : vector<4x256xf32>
    %cst_3 = arith.constant dense<0.000000e+00> : vector<4xf32>
    %9 = vector.multi_reduction <add>, %8, %cst_3 [1] : vector<4x256xf32> to vector<4xf32>
    %10 = vector.shape_cast %9 : vector<4xf32> to vector<4x1xf32>
    %cst_4 = arith.constant 2.550000e+02 : f32
    %11 = vector.broadcast %cst_4 : f32 to vector<4x1xf32>
    %12 = arith.divf %10, %11 : vector<4x1xf32>
    %cst_5 = arith.constant 9.99999974E-6 : f32
    %13 = vector.broadcast %cst_5 : f32 to vector<4x1xf32>
    %14 = arith.addf %12, %13 : vector<4x1xf32>
    %15 = math.rsqrt %14 : vector<4x1xf32>
    %16 = vector.shape_cast %3 : vector<4x1xf32> to vector<1x4x1xf32>
    %cst_6 = arith.constant dense<0.000000e+00> : vector<1xf32>
    %17 = vector.multi_reduction <add>, %16, %cst_6 [1, 2] : vector<1x4x1xf32> to vector<1xf32>
    %18 = vector.shape_cast %17 : vector<1xf32> to vector<1x1x1xf32>
    %19 = vector.extract %18[0, 0, 0] : f32 from vector<1x1x1xf32>
    %cst_7 = arith.constant 1.024000e+03 : f32
    %20 = arith.divf %19, %cst_7 : f32
    %21 = vector.broadcast %20 : f32 to vector<4x1xf32>
    %22 = arith.subf %5, %21 : vector<4x1xf32>
    %cst_8 = arith.constant 2.560000e+02 : f32
    %23 = vector.broadcast %cst_8 : f32 to vector<4x1xf32>
    %24 = arith.mulf %23, %22 : vector<4x1xf32>
    %25 = arith.mulf %24, %22 : vector<4x1xf32>
    %26 = arith.addf %10, %25 : vector<4x1xf32>
    %27 = vector.shape_cast %26 : vector<4x1xf32> to vector<1x4x1xf32>
    %cst_9 = arith.constant dense<0.000000e+00> : vector<1xf32>
    %28 = vector.multi_reduction <add>, %27, %cst_9 [1, 2] : vector<1x4x1xf32> to vector<1xf32>
    %29 = vector.shape_cast %28 : vector<1xf32> to vector<1x1x1xf32>
    %30 = vector.extract %29[0, 0, 0] : f32 from vector<1x1x1xf32>
    %cst_10 = arith.constant 1.023000e+03 : f32
    %31 = arith.divf %30, %cst_10 : f32
    %cst_11 = arith.constant 9.99999974E-6 : f32
    %32 = arith.addf %31, %cst_11 : f32
    %33 = math.rsqrt %32 : f32
    %c0_12 = arith.constant 0 : index
    %c0_13 = arith.constant 0 : index
    %c0_14 = arith.constant 0 : index
    %34 = vector.load %arg4[%c0_12, %c0_13, %c0_14] : memref<1x4x1xf32, #tpu.memory_space<vmem>>, vector<1x4x1xf32>
    %35 = vector.shape_cast %34 : vector<1x4x1xf32> to vector<4x1xf32>
    %c0_15 = arith.constant 0 : index
    %c0_16 = arith.constant 0 : index
    %c0_17 = arith.constant 0 : index
    %36 = vector.load %arg2[%c0_15, %c0_16, %c0_17] : memref<1x4x1xf32, #tpu.memory_space<vmem>>, vector<1x4x1xf32>
    %37 = vector.shape_cast %36 : vector<1x4x1xf32> to vector<4x1xf32>
    %c0_18 = arith.constant 0 : index
    %c0_19 = arith.constant 0 : index
    %c0_20 = arith.constant 0 : index
    %38 = vector.load %arg3[%c0_18, %c0_19, %c0_20] : memref<1x4x1xf32, #tpu.memory_space<vmem>>, vector<1x4x1xf32>
    %39 = vector.shape_cast %38 : vector<1x4x1xf32> to vector<4x1xf32>
    %40 = arith.mulf %35, %15 : vector<4x1xf32>
    %cst_21 = arith.constant 1.000000e+00 : f32
    %41 = vector.broadcast %cst_21 : f32 to vector<4x1xf32>
    %42 = arith.subf %41, %35 : vector<4x1xf32>
    %43 = vector.broadcast %33 : f32 to vector<4x1xf32>
    %44 = arith.mulf %42, %43 : vector<4x1xf32>
    %45 = arith.addf %40, %44 : vector<4x1xf32>
    %46 = arith.mulf %5, %15 : vector<4x1xf32>
    %47 = arith.mulf %35, %46 : vector<4x1xf32>
    %cst_22 = arith.constant 1.000000e+00 : f32
    %48 = vector.broadcast %cst_22 : f32 to vector<4x1xf32>
    %49 = arith.subf %48, %35 : vector<4x1xf32>
    %50 = arith.mulf %20, %33 : f32
    %51 = vector.broadcast %50 : f32 to vector<4x1xf32>
    %52 = arith.mulf %49, %51 : vector<4x1xf32>
    %53 = arith.addf %47, %52 : vector<4x1xf32>
    %54 = arith.mulf %37, %45 : vector<4x1xf32>
    %55 = arith.mulf %37, %53 : vector<4x1xf32>
    %56 = arith.subf %39, %55 : vector<4x1xf32>
    %57 = vector.broadcast %54 : vector<4x1xf32> to vector<4x256xf32>
    %58 = arith.mulf %1, %57 : vector<4x256xf32>
    %59 = vector.broadcast %56 : vector<4x1xf32> to vector<4x256xf32>
    %60 = arith.addf %58, %59 : vector<4x256xf32>
    %c0_23 = arith.constant 0 : index
    %c0_24 = arith.constant 0 : index
    %c0_25 = arith.constant 0 : index
    %61 = vector.load %arg5[%c0_23, %c0_24, %c0_25] : memref<1x4x256xf32, #tpu.memory_space<vmem>>, vector<1x4x256xf32>
    %62 = vector.shape_cast %61 : vector<1x4x256xf32> to vector<4x256xf32>
    %63 = vector.shape_cast %60 : vector<4x256xf32> to vector<1x4x256xf32>
    tpu.vector_store %arg5[%c0_23, %c0_24, %c0_25], %63 {strides = array<i32>} : memref<1x4x256xf32, #tpu.memory_space<vmem>>, vector<1x4x256xf32>,
    return
  }
  func.func @transform_0(%arg0: i32) -> (i32, i32, i32) {
    %c0_i32 = arith.constant 0 : i32
    %c0_i32_0 = arith.constant 0 : i32
    %c0_i32_1 = arith.constant 0 : i32
    return %arg0, %c0_i32, %c0_i32_0 : i32, i32, i32
  }
  func.func @transform_1(%arg0: i32) -> (i32, i32, i32) {
    %c0_i32 = arith.constant 0 : i32
    %c0_i32_0 = arith.constant 0 : i32
    %c0_i32_1 = arith.constant 0 : i32
    return %arg0, %c0_i32, %c0_i32_0 : i32, i32, i32
  }
  func.func @transform_2(%arg0: i32) -> (i32, i32, i32) {
    %c0_i32 = arith.constant 0 : i32
    %c0_i32_0 = arith.constant 0 : i32
    %c0_i32_1 = arith.constant 0 : i32
    return %arg0, %c0_i32, %c0_i32_0 : i32, i32, i32
  }
  func.func @transform_3(%arg0: i32) -> (i32, i32, i32) {
    %c0_i32 = arith.constant 0 : i32
    %c0_i32_0 = arith.constant 0 : i32
    %c0_i32_1 = arith.constant 0 : i32
    %c0_i32_2 = arith.constant 0 : i32
    return %c0_i32, %c0_i32_0, %c0_i32_1 : i32, i32, i32
  }
  func.func @transform_4(%arg0: i32) -> (i32, i32, i32) {
    %c0_i32 = arith.constant 0 : i32
    %c0_i32_0 = arith.constant 0 : i32
    %c0_i32_1 = arith.constant 0 : i32
    return %arg0, %c0_i32, %c0_i32_0 : i32, i32, i32
  }
}

</mosaic_0001>

<llo_original>
// kernel: tpu_custom_call.1
$region0: #{tpu_custom_call.1}
  #allocation0 [shape = 'u32[]', space=smem, size = 0x4, offset = 0x4, fixed_abs, tag = 'smem constant byte address 0x4 - core index']
  #allocation1 [shape = 'u32[144,128]{1,0:T(1,128)}', space=vmem, size = 0x12000, scoped, tag = 'internal scratch']
  %s0 = inlined_call_operand.vmem [shape: f32[2,4,256], index: 0, kind: input, shape index: {}]
  %s1 = inlined_call_operand.vmem [shape: f32[2,4,1], index: 1, kind: input, shape index: {}]
  %s2 = inlined_call_operand.vmem [shape: f32[2,4,1], index: 2, kind: input, shape index: {}]
  %s3 = inlined_call_operand.vmem [shape: f32[1,4,1], index: 3, kind: input, shape index: {}]
  %s4 = inlined_call_operand.hbm [shape: f32[2,4,256], index: 4, kind: output, shape index: {}]
  %s5 = sld [smem:[#allocation0]]
  $region49: #{tpu_custom_call.1} parent=0
    _
  %s7 = ssub.s32 1, %s5
  %s8 = scalar_select 0, %s7, %s5
  $region1: #{tpu_custom_call.1} parent=0
    #allocation2 [shape = 'u8[8192]{0}', space=vmem, size = 0x2000, scoped, tag = 'output window, operand 0']
    #allocation3 [shape = 's32[2]{0}', space=sflag, size = 0x8, scoped, tag = 'scoped memory for tpu_custom_call.1']
    %9 = vsyncpa [#allocation3], 0
    %s10 = scalar_lea.sflag [#allocation3], 1
    %11 = vsyncpa %s10, 0
    loop: start=0, step=1, limit=4
    $region2: #{tpu_custom_call.1} parent=1 // loop_pre_header
      _
    $region3: #{tpu_custom_call.1} parent=1 // loop_header
      %s13 = sphi 0, %s17
      %p14 = scmp.ge.s32.totalorder %s13, 4
      %s23 = sphi 0, %s25
      %s26 = sphi 0, %s23
      %s27 = sphi 0, %s26
      %s43 = sphi 0, %s27
      %s49 = sphi 0, %s51
      %s52 = sphi 0, %s49
      %s53 = sphi 0, %s52
      %s69 = sphi 0, %s53
      %s75 = sphi 0, %s77
      %s78 = sphi 0, %s75
      %s79 = sphi 0, %s78
      %s95 = sphi 0, %s79
      %s99 = sphi 0, %s99
      %s101 = sphi 0, %s99
      %s102 = sphi 0, %s101
      %s116 = sphi 0, %s102
      %s122 = sphi 0, %s124
      %s125 = sphi 0, %s122
      %s126 = sphi 0, %s125
      %s142 = sphi 0, %s126
    $region4: #{tpu_custom_call.1} parent=1 // loop_header_branch
      %16 = sbr.rel (%p14) target = $region8
    $region5: #{tpu_custom_call.1} parent=1 // loop_body
      %s18 = ssub.s32 %s13, 1
      %s19 = ssub.s32 %s13, 2
      %s20 = sadd.s32 %s13, 1
      %s21 = ssub.s32 %s13, %s20
      %p22 = scmp.eq.s32.totalorder %s21, 0
      %s24 = sadd.s32 %s23, 1
      %s25 = scalar_select %p22, %s23, %s24
      %p28 = pneg %p22
      %p29 = scmp.eq.s32.totalorder %s13, 1
      %p30 = por %p28, %p29
      %p31 = scmp.ne.s32.totalorder %s23, %s26
      %p32 = scmp.eq.s32.totalorder %s13, 0
      %p33 = por %p31, %p32
      %p34 = scmp.ne.s32.totalorder %s23, %s26
      %p35 = scmp.eq.s32.totalorder %s18, 1
      %p36 = por %p34, %p35
      %p37 = scmp.ne.s32.totalorder %s26, %s27
      %p38 = scmp.eq.s32.totalorder %s18, 0
      %p39 = por %p37, %p38
      %p40 = scmp.ne.s32.totalorder %s26, %s27
      %p41 = scmp.eq.s32.totalorder %s19, 1
      %p42 = por %p40, %p41
      %p44 = scmp.ne.s32.totalorder %s27, %s43
      %p45 = scmp.eq.s32.totalorder %s19, 0
      %p46 = por %p44, %p45
      %s47 = ssub.s32 %s13, %s20
      %p48 = scmp.eq.s32.totalorder %s47, 0
      %s50 = sadd.s32 %s49, 1
      %s51 = scalar_select %p48, %s49, %s50
      %p54 = pneg %p48
      %p55 = scmp.eq.s32.totalorder %s13, 1
      %p56 = por %p54, %p55
      %p57 = scmp.ne.s32.totalorder %s49, %s52
      %p58 = scmp.eq.s32.totalorder %s13, 0
      %p59 = por %p57, %p58
      %p60 = scmp.ne.s32.totalorder %s49, %s52
      %p61 = scmp.eq.s32.totalorder %s18, 1
      %p62 = por %p60, %p61
      %p63 = scmp.ne.s32.totalorder %s52, %s53
      %p64 = scmp.eq.s32.totalorder %s18, 0
      %p65 = por %p63, %p64
      %p66 = scmp.ne.s32.totalorder %s52, %s53
      %p67 = scmp.eq.s32.totalorder %s19, 1
      %p68 = por %p66, %p67
      %p70 = scmp.ne.s32.totalorder %s53, %s69
      %p71 = scmp.eq.s32.totalorder %s19, 0
      %p72 = por %p70, %p71
      %s73 = ssub.s32 %s13, %s20
      %p74 = scmp.eq.s32.totalorder %s73, 0
      %s76 = sadd.s32 %s75, 1
      %s77 = scalar_select %p74, %s75, %s76
      %p80 = pneg %p74
      %p81 = scmp.eq.s32.totalorder %s13, 1
      %p82 = por %p80, %p81
      %p83 = scmp.ne.s32.totalorder %s75, %s78
      %p84 = scmp.eq.s32.totalorder %s13, 0
      %p85 = por %p83, %p84
      %p86 = scmp.ne.s32.totalorder %s75, %s78
      %p87 = scmp.eq.s32.totalorder %s18, 1
      %p88 = por %p86, %p87
      %p89 = scmp.ne.s32.totalorder %s78, %s79
      %p90 = scmp.eq.s32.totalorder %s18, 0
      %p91 = por %p89, %p90
      %p92 = scmp.ne.s32.totalorder %s78, %s79
      %p93 = scmp.eq.s32.totalorder %s19, 1
      %p94 = por %p92, %p93
      %p96 = scmp.ne.s32.totalorder %s79, %s95
      %p97 = scmp.eq.s32.totalorder %s19, 0
      %p98 = por %p96, %p97
      %s100 = sadd.s32 %s99, 1
      %p103 = scmp.eq.s32.totalorder %s13, 1
      %p104 = scmp.ne.s32.totalorder %s99, %s101
      %p105 = scmp.eq.s32.totalorder %s13, 0
      %p106 = por %p104, %p105
      %p107 = scmp.ne.s32.totalorder %s99, %s101
      %p108 = scmp.eq.s32.totalorder %s18, 1
      %p109 = por %p107, %p108
      %p110 = scmp.ne.s32.totalorder %s101, %s102
      %p111 = scmp.eq.s32.totalorder %s18, 0
      %p112 = por %p110, %p111
      %p113 = scmp.ne.s32.totalorder %s101, %s102
      %p114 = scmp.eq.s32.totalorder %s19, 1
      %p115 = por %p113, %p114
      %p117 = scmp.ne.s32.totalorder %s102, %s116
      %p118 = scmp.eq.s32.totalorder %s19, 0
      %p119 = por %p117, %p118
      %s120 = ssub.s32 %s13, %s20
      %p121 = scmp.eq.s32.totalorder %s120, 0
      %s123 = sadd.s32 %s122, 1
      %s124 = scalar_select %p121, %s122, %s123
      %p127 = pneg %p121
      %p128 = scmp.eq.s32.totalorder %s13, 1
      %p129 = por %p127, %p128
      %p130 = scmp.ne.s32.totalorder %s122, %s125
      %p131 = scmp.eq.s32.totalorder %s13, 0
      %p132 = por %p130, %p131
      %p133 = scmp.ne.s32.totalorder %s122, %s125
      %p134 = scmp.eq.s32.totalorder %s18, 1
      %p135 = por %p133, %p134
      %p136 = scmp.ne.s32.totalorder %s125, %s126
      %p137 = scmp.eq.s32.totalorder %s18, 0
      %p138 = por %p136, %p137
      %p139 = scmp.ne.s32.totalorder %s125, %s126
      %p140 = scmp.eq.s32.totalorder %s19, 1
      %p141 = por %p139, %p140
      %p143 = scmp.ne.s32.totalorder %s126, %s142
      %p144 = scmp.eq.s32.totalorder %s19, 0
      %p145 = por %p143, %p144
      %p146 = scmp.le.s32.totalorder 1, %s13
      %p147 = scmp.lt.s32.totalorder %s13, 3
      %p148 = pnand %p146, %p147
      %p149 = pneg %p148
      // Predicated region
      $region9: #{tpu_custom_call.1} parent=5 // pred_check
        _
      $region10: #{tpu_custom_call.1} parent=5 // pred_check_branch
        %151 = sbr.rel (%p148) target = $region12
      $region11: #{tpu_custom_call.1} parent=5 // pred_region
        %s152 = ssub.s32 %s13, 1
        // Predicated region
        $region13: #{tpu_custom_call.1} parent=11 // pred_check
          %p153 = pneg %p112
        $region14: #{tpu_custom_call.1} parent=11 // pred_check_branch
          %155 = sbr.rel (%p153) target = $region16
        $region15: #{tpu_custom_call.1} parent=11 // pred_region
          _
        $region16: #{tpu_custom_call.1} parent=11 // pred_fallthru
          _
      $region12: #{tpu_custom_call.1} parent=5 // pred_fallthru
        _
      %p156 = scmp.lt.s32.totalorder %s13, 2
      // Predicated region
      $region17: #{tpu_custom_call.1} parent=5 // pred_check
        %p157 = pneg %p156
      $region18: #{tpu_custom_call.1} parent=5 // pred_check_branch
        %159 = sbr.rel (%p157) target = $region20
      $region19: #{tpu_custom_call.1} parent=5 // pred_region
        // Predicated region
        $region21: #{tpu_custom_call.1} parent=19 // pred_check
          %p160 = pneg %p33
        $region22: #{tpu_custom_call.1} parent=19 // pred_check_branch
          %162 = sbr.rel (%p160) target = $region24
        $region23: #{tpu_custom_call.1} parent=19 // pred_region
          %p163 = scmp.lt.s32.totalorder %s13, 1
          %s164 = scalar_select %p163, %s13, 1
          %s165 = smul.addr %s164, 2
          %s166 = smul.addr %s165, 4
          %s167 = scalar_lea.vmem %s0, %s166
        $region24: #{tpu_custom_call.1} parent=19 // pred_fallthru
          _
        // Predicated region
        $region25: #{tpu_custom_call.1} parent=19 // pred_check
          %p168 = pneg %p59
        $region26: #{tpu_custom_call.1} parent=19 // pred_check_branch
          %170 = sbr.rel (%p168) target = $region28
        $region27: #{tpu_custom_call.1} parent=19 // pred_region
          %p171 = scmp.lt.s32.totalorder %s13, 1
          %s172 = scalar_select %p171, %s13, 1
          %s173 = smul.addr %s172, 4
          %s174 = scalar_lea.vmem %s1, %s173
        $region28: #{tpu_custom_call.1} parent=19 // pred_fallthru
          _
        // Predicated region
        $region29: #{tpu_custom_call.1} parent=19 // pred_check
          %p175 = pneg %p85
        $region30: #{tpu_custom_call.1} parent=19 // pred_check_branch
          %177 = sbr.rel (%p175) target = $region32
        $region31: #{tpu_custom_call.1} parent=19 // pred_region
          %p178 = scmp.lt.s32.totalorder %s13, 1
          %s179 = scalar_select %p178, %s13, 1
          %s180 = smul.addr %s179, 4
          %s181 = scalar_lea.vmem %s2, %s180
        $region32: #{tpu_custom_call.1} parent=19 // pred_fallthru
          _
      $region20: #{tpu_custom_call.1} parent=5 // pred_fallthru
        _
      %p182 = scmp.le.s32.totalorder 1, %s13
      %p183 = scmp.lt.s32.totalorder %s13, 3
      %p184 = pnand %p182, %p183
      %p185 = pneg %p184
      // Predicated region
      $region33: #{tpu_custom_call.1} parent=5 // pred_check
        _
      $region34: #{tpu_custom_call.1} parent=5 // pred_check_branch
        %187 = sbr.rel (%p184) target = $region36
      $region35: #{tpu_custom_call.1} parent=5 // pred_region
        %s188 = ssub.s32 %s13, 1
        %p189 = scmp.lt.s32.totalorder %s18, 1
        %s190 = scalar_select %p189, %s18, 1
        %s191 = smul.addr %s190, 2
        %s192 = smul.addr %s191, 4
        %s193 = scalar_lea.vmem %s0, %s192
        %p194 = pneg %p39
        %p195 = pneg %p36
        %p196 = scmp.lt.s32.totalorder %s18, 1
        %s197 = scalar_select %p196, %s18, 1
        %s198 = smul.addr %s197, 4
        %s199 = scalar_lea.vmem %s1, %s198
        %p200 = pneg %p65
        %p201 = pneg %p62
        %p202 = scmp.lt.s32.totalorder %s18, 1
        %s203 = scalar_select %p202, %s18, 1
        %s204 = smul.addr %s203, 4
        %s205 = scalar_lea.vmem %s2, %s204
        %p206 = pneg %p91
        %p207 = pneg %p88
        %p208 = pneg %p112
        %p209 = pneg %p109
        %p210 = pneg %p138
        %p211 = pneg %p135
        %s212 = sand.u32 %s125, 1
        %s213 = scalar_lea.sflag [#allocation3], %s212
        %s214 = sand.u32 %s125, 1
        %s215 = smul.addr %s214, 8
        %s216 = scalar_lea.vmem [#allocation2], %s215
        %p217 = scmp.lt.s32.totalorder %s18, 1
        %s218 = scalar_select %p217, %s18, 1
        %s219 = smul.addr %s218, 2
        %s220 = smul.addr %s219, 4
        %s221 = scalar_lea.vmem %s0, %s220
        %p222 = scmp.lt.s32.totalorder %s18, 1
        %s223 = scalar_select %p222, %s18, 1
        %s224 = smul.addr %s223, 4
        %s225 = scalar_lea.vmem %s1, %s224
        %p226 = scmp.lt.s32.totalorder %s18, 1
        %s227 = scalar_select %p226, %s18, 1
        %s228 = smul.addr %s227, 4
        %s229 = scalar_lea.vmem %s2, %s228
        %v230 = vld [vmem:[%s221] sm:$0xff]
        %v232 = vcombine.high %v230, %v230
        %vm234 = vcmask 1043456
        %v235 = vsel %vm234, %v230, 0.0
        %v236 = vsel %vm234, %v232, 0.0
        %v237 = vadd.f32 %v235, %v236
        %238 = vadd.xlane.f32.xlu0 %v237
        %v239 = vpop.xlane.xlu0 %238
        %v240 = vrcp.pop 256.0
        %v241 = vmul.f32 %v239, %v240
        %v244 = vunpack.c.l.s4 839922192
        %v245 = vunpack.c.0.s8 %v244
        %v246 = vlaneseq
        %v247 = vshrl.u32 %v246, 7
        %v248 = vsub.s32 %v245, %v247
        %v249 = vrot.slane %v241, %v248
        %v251 = vsub.f32 %v230, %v249
        %v252 = vmul.f32 %v251, %v251
        %v254 = vcombine.high %v252, %v252
        %v256 = vsel %vm234, %v252, 0.0
        %v257 = vsel %vm234, %v254, 0.0
        %v258 = vadd.f32 %v256, %v257
        %259 = vadd.xlane.f32.xlu0 %v258
        %v260 = vpop.xlane.xlu0 %259
        %v261 = vrcp.pop 255.0
        %v262 = vmul.f32 %v260, %v261
        %v263 = vadd.f32 %v262, 1e-05
        %v264 = vrsqrt.pop %v263
        %vm265 = vcmask 3072
        %v266 = vsel %vm265, %v239, 0.0
        %267 = vadd.xlane.f32.xlu0 %v266
        %v268 = vpop.xlane.xlu0 %267
        %v269 = vrot.slane %v268, 4
        %v270 = vadd.f32 %v268, %v269
        %v271 = vrot.slane %v270, 2
        %v272 = vadd.f32 %v270, %v271
        %v273 = vrot.slane %v272, 1
        %v274 = vadd.f32 %v272, %v273
        %s275 = vtos %v274
        %v276 = vrcp.pop 1024.0
        %s277 = vtos %v276
        %s278 = smul.f32 %s275, %s277
        %v279 = vstv %s278
        %v280 = vsub.f32 %v241, %v279
        %v281 = vmul.f32 %v280, 256.0
        %v282 = vmul.f32 %v281, %v280
        %v283 = vadd.f32 %v260, %v282
        %v284 = vsel %vm265, %v283, 0.0
        %285 = vadd.xlane.f32.xlu0 %v284
        %v286 = vpop.xlane.xlu0 %285
        %v287 = vrot.slane %v286, 4
        %v288 = vadd.f32 %v286, %v287
        %v289 = vrot.slane %v288, 2
        %v290 = vadd.f32 %v288, %v289
        %v291 = vrot.slane %v290, 1
        %v292 = vadd.f32 %v290, %v291
        %s293 = vtos %v292
        %v294 = vrcp.pop 1023.0
        %s295 = vtos %v294
        %s296 = smul.f32 %s293, %s295
        %s297 = sadd.f32 %s296, 1e-05
        %v298 = vstv %s297
        %v299 = vrsqrt.pop %v298
        %s300 = vtos %v299
        %v301 = vld [vmem:[%s3] sm:$0xf]
        %v302 = vld [vmem:[%s225] sm:$0xf]
        %v303 = vld [vmem:[%s229] sm:$0xf]
        %v304 = vmul.f32 %v301, %v264
        %v305 = vsub.f32 1.0, %v301
        %v306 = vstv %s300
        %v307 = vmul.f32 %v305, %v306
        %v308 = vadd.f32 %v304, %v307
        %v309 = vmul.f32 %v241, %v264
        %v310 = vmul.f32 %v301, %v309
        %s311 = smul.f32 %s278, %s300
        %v312 = vstv %s311
        %v313 = vmul.f32 %v305, %v312
        %v314 = vadd.f32 %v310, %v313
        %v315 = vmul.f32 %v302, %v308
        %v316 = vmul.f32 %v302, %v314
        %v317 = vsub.f32 %v303, %v316
        %319 = vset.pattern.permute.xlu0 0
        %320 = vperm.xlu0 %319, %v315
        %v321 = vpop.permute.xlu0 %320
        %v323 = vunpack.c.l.s4 839922192
        %v324 = vunpack.c.0.s8 %v323
        %v325 = vlaneseq
        %v326 = vshrl.u32 %v325, 7
        %v327 = vsub.s32 %v324, %v326
        %v328 = vrot.slane %v321, %v327
        %v330 = vmul.f32 %v230, %v328
        %332 = vset.pattern.permute.xlu0 0
        %333 = vperm.xlu0 %332, %v317
        %v334 = vpop.permute.xlu0 %333
        %v336 = vunpack.c.l.s4 839922192
        %v337 = vunpack.c.0.s8 %v336
        %v338 = vlaneseq
        %v339 = vshrl.u32 %v338, 7
        %v340 = vsub.s32 %v337, %v339
        %v341 = vrot.slane %v334, %v340
        %v343 = vadd.f32 %v330, %v341
        %344 = vst [vmem:[%s216] sm:$0xff] %v343
        %s345 = sand.u32 %s125, 1
        %s346 = scalar_lea.sflag [#allocation3], %s345
        %s347 = sand.u32 %s125, 1
        %s348 = smul.addr %s347, 8
        %s349 = scalar_lea.vmem [#allocation2], %s348
        // Predicated region
        $region37: #{tpu_custom_call.1} parent=35 // pred_check
          %p350 = pneg %p135
        $region38: #{tpu_custom_call.1} parent=35 // pred_check_branch
          %352 = sbr.rel (%p350) target = $region40
        $region39: #{tpu_custom_call.1} parent=35 // pred_region
          %s354 = ssub.s32 128, 128
          %355 = vsyncadd %s346, %s354
          %s356 = smul.addr %s18, 2
          %s357 = smul.addr %s356, 64
          %s358 = scalar_lea.hbm %s4, %s357
          %s360 = sshll.u32 %s349, 4
          %s361 = int_to_ptr.vmem [resolvable:$true] %s360
          %363 = dma.vmem_to_hbm [thread:$0]  %s361, 128, %s358, %s346
        $region40: #{tpu_custom_call.1} parent=35 // pred_fallthru
          _
      $region36: #{tpu_custom_call.1} parent=5 // pred_fallthru
        _
      %p364 = scmp.le.s32.totalorder 2, %s13
      // Predicated region
      $region41: #{tpu_custom_call.1} parent=5 // pred_check
        %p365 = pneg %p364
      $region42: #{tpu_custom_call.1} parent=5 // pred_check_branch
        %367 = sbr.rel (%p365) target = $region44
      $region43: #{tpu_custom_call.1} parent=5 // pred_region
        %s368 = ssub.s32 %s13, 2
        // Predicated region
        $region45: #{tpu_custom_call.1} parent=43 // pred_check
          %p369 = pneg %p141
        $region46: #{tpu_custom_call.1} parent=43 // pred_check_branch
          %371 = sbr.rel (%p369) target = $region48
        $region47: #{tpu_custom_call.1} parent=43 // pred_region
          %s372 = sand.u32 %s126, 1
          %s373 = scalar_lea.sflag [#allocation3], %s372
          %s374 = sand.u32 %s126, 1
          %s375 = smul.addr %s374, 8
          %s376 = scalar_lea.vmem [#allocation2], %s375
          %377 = dma.done %s373, 128
        $region48: #{tpu_custom_call.1} parent=43 // pred_fallthru
          _
      $region44: #{tpu_custom_call.1} parent=5 // pred_fallthru
        _
    $region6: #{tpu_custom_call.1} parent=1 // loop_footer
      %s17 = sadd.s32 1, %s13
    $region7: #{tpu_custom_call.1} parent=1 // loop_footer_branch
      %12 = sbr.rel target = $region3
    $region8: #{tpu_custom_call.1} parent=1 // loop_exit
      _
    %378 = vsyncpa [#allocation3], 1
    %s379 = scalar_lea.sflag [#allocation3], 1
    %380 = vsyncpa %s379, 1

</llo_original>
